<compile_context>
chip_gen: v7x
topology: tpu7x:2x2x1
jax: 0.10.0
libtpu: 0.0.40
codegen_flags: <defaults>
</compile_context>

<pallas_src>
import jax
import jax.numpy as jnp
from jax.experimental import pallas as pl
from jax.experimental.pallas import tpu as pltpu


def _round_up(n, m):
    return ((n + m - 1) // m) * m


def _resblock_kernel(x_ref, wdil_ref, wpost_ref, bpost_ref, out_ref):
    # x_ref: (tm, 2C) = [x[t] | x[t+dilation]] lane-concatenated.
    # Dilated causal conv (k=2, no bias) as a single K=2C matmul.
    y = jnp.dot(x_ref[...], wdil_ref[...], preferred_element_type=jnp.float32)
    # Gated activation unit.
    g = jnp.tanh(y) * jax.nn.sigmoid(y)
    # Fused 1x1 convs: [2*W_res | W_skip (lane-padded)] -> one N-dense matmul.
    out = jnp.dot(g, wpost_ref[...], preferred_element_type=jnp.float32) + bpost_ref[...]
    out_ref[...] = out.astype(out_ref.dtype)


def residual_block_pallas(x_nct, params, *, dilation, skip_size):
    """x_nct: (B, res_ch, T) float32. Returns (res_nct, skip_nct) in NCT layout."""
    w0t, w1t, wrt, br, wst, bs = params
    B, C, T = x_nct.shape
    C_skip = wst.shape[1]
    t_out = T - dilation
    assert 0 < skip_size <= t_out

    # ---- wrapper-side layout plumbing (cheap XLA ops, outside the kernel) ----
    x_ntc = jnp.transpose(x_nct, (0, 2, 1))                     # NCT -> NTC
    x_lo = x_ntc[:, :t_out, :]                                  # taps at t
    x_hi = x_ntc[:, dilation:dilation + t_out, :]               # taps at t + d
    x_cat = jnp.concatenate([x_lo, x_hi], axis=-1)              # (B, t_out, 2C)
    M = B * t_out
    x_flat = x_cat.reshape(M, 2 * C)                            # batch folded into M

    # M tile: as large as comfortably fits, multiple of 8 sublanes.
    tm = min(512, _round_up(M, 8))
    M_pad = _round_up(M, tm)
    if M_pad != M:
        x_flat = jnp.pad(x_flat, ((0, M_pad - M), (0, 0)))

    # Fused dilated-conv weight (K = 2C).
    w_dil = jnp.concatenate([w0t, w1t], axis=0)                 # (2C, C)

    # Fused 1x1 weights, skip lane-padded to a multiple of 128, 2x folded in.
    Cs_pad = _round_up(C_skip, 128)
    wst_p = jnp.pad(wst, ((0, 0), (0, Cs_pad - C_skip)))
    bs_p = jnp.pad(bs, ((0, 0), (0, Cs_pad - C_skip)))
    w_post = jnp.concatenate([2.0 * wrt, wst_p], axis=1)        # (C, C + Cs_pad)
    b_post = jnp.concatenate([2.0 * br, bs_p], axis=1)          # (1, C + Cs_pad)
    C_out = C + Cs_pad

    out_flat = pl.pallas_call(
        _resblock_kernel,
        out_shape=jax.ShapeDtypeStruct((M_pad, C_out), x_nct.dtype),
        grid_spec=pltpu.PrefetchScalarGridSpec(
            num_scalar_prefetch=0,
            grid=(M_pad // tm,),
            in_specs=[
                pl.BlockSpec((tm, 2 * C), lambda i: (i, 0)),    # x tile
                pl.BlockSpec((2 * C, C), lambda i: (0, 0)),     # fused dilated weight
                pl.BlockSpec((C, C_out), lambda i: (0, 0)),     # fused res|skip weight
                pl.BlockSpec((1, C_out), lambda i: (0, 0)),     # fused bias
            ],
            out_specs=pl.BlockSpec((tm, C_out), lambda i: (i, 0)),
        ),
        compiler_params=pltpu.CompilerParams(
            dimension_semantics=("parallel",),
        ),
    )(x_flat, w_dil, w_post, b_post)

    out = out_flat[:M].reshape(B, t_out, C_out)
    res_ntc = out[:, :, :C]                                     # already includes 2x
    skip_ntc = out[:, t_out - skip_size:, C:C + C_skip]
    # NTC -> NCT to match PyTorch output convention.
    return jnp.transpose(res_ntc, (0, 2, 1)), jnp.transpose(skip_ntc, (0, 2, 1))


def residual_block_ref(x_nct, params, *, dilation, skip_size):
    """Pure-JAX reference (same math, no Pallas) for verification."""
    w0t, w1t, wrt, br, wst, bs = params
    x_ntc = jnp.transpose(x_nct, (0, 2, 1))
    t_out = x_ntc.shape[1] - dilation
    x_lo = x_ntc[:, :t_out, :]
    x_hi = x_ntc[:, dilation:dilation + t_out, :]
    y = x_lo @ w0t + x_hi @ w1t
    g = jnp.tanh(y) * jax.nn.sigmoid(y)
    res = 2.0 * (g @ wrt + br)          # x += x[:, :, -x.size(2):]  (full alias) == 2*x
    skip = (g @ wst + bs)[:, t_out - skip_size:, :]
    return jnp.transpose(res, (0, 2, 1)), jnp.transpose(skip, (0, 2, 1))


def init_params(key, res_channels, skip_channels):
    """Deterministic synthetic parameters (PyTorch-like uniform init scale)."""
    k = jax.random.split(key, 6)
    # Conv1d(res, res, 2, bias=False): weight (res, res, 2) -> two taps stored
    # transposed as (Cin, Cout) so the kernel does x @ W^T directly.
    s_dil = 1.0 / jnp.sqrt(res_channels * 2.0)
    w0t = jax.random.uniform(k[0], (res_channels, res_channels), jnp.float32, -s_dil, s_dil)
    w1t = jax.random.uniform(k[1], (res_channels, res_channels), jnp.float32, -s_dil, s_dil)
    # Conv1d(res, res, 1) with bias.
    s_res = 1.0 / jnp.sqrt(res_channels * 1.0)
    wrt = jax.random.uniform(k[2], (res_channels, res_channels), jnp.float32, -s_res, s_res)
    br = jax.random.uniform(k[3], (1, res_channels), jnp.float32, -s_res, s_res)
    # Conv1d(res, skip, 1) with bias.
    wst = jax.random.uniform(k[4], (res_channels, skip_channels), jnp.float32, -s_res, s_res)
    bs = jax.random.uniform(k[5], (1, skip_channels), jnp.float32, -s_res, s_res)
    return (w0t, w1t, wrt, br, wst, bs)


if __name__ == "__main__":
    # Small shapes consistent with the module (res/skip channels, NCT input).
    B, RES_CH, SKIP_CH, T = 2, 128, 64, 34
    DILATION, SKIP_SIZE = 2, 16

    key = jax.random.PRNGKey(0)
    kx, kp = jax.random.split(key)
    x = jax.random.normal(kx, (B, RES_CH, T), jnp.float32)   # NCT like PyTorch
    params = init_params(kp, RES_CH, SKIP_CH)

    res_out, skip_out = residual_block_pallas(x, params, dilation=DILATION,
                                              skip_size=SKIP_SIZE)
    jax.block_until_ready((res_out, skip_out))

    res_r, skip_r = residual_block_ref(x, params, dilation=DILATION,
                                       skip_size=SKIP_SIZE)
    assert res_out.shape == (B, RES_CH, T - DILATION)
    assert skip_out.shape == (B, SKIP_CH, SKIP_SIZE)
    assert jnp.allclose(res_out, res_r, atol=2e-3, rtol=2e-3)
    assert jnp.allclose(skip_out, skip_r, atol=2e-3, rtol=2e-3)

    print("KERNEL_OK")
</pallas_src>

<mosaic_0001>
module attributes {stable_mosaic.version = 11 : i64} {
  func.func @_resblock_kernel(%arg0: i32, %arg1: memref<64x256xf32, #tpu.memory_space<vmem>>, %arg2: memref<256x128xf32, #tpu.memory_space<vmem>>, %arg3: memref<128x256xf32, #tpu.memory_space<vmem>>, %arg4: memref<1x256xf32, #tpu.memory_space<vmem>>, %arg5: memref<64x256xf32, #tpu.memory_space<vmem>>) attributes {dimension_semantics = [#tpu.dimension_semantics<parallel>], iteration_bounds = array<i64: 1>, scalar_prefetch = 0 : i64, scratch_operands = 0 : i64, tpu.core_type = #tpu.core_type<tc>, window_params = [{transform_indices = @transform_0, window_bounds = array<i64: 64, 256>}, {pipeline_mode = #tpu.pipeline_mode<synchronous>, transform_indices = @transform_1, window_bounds = array<i64: 256, 128>}, {pipeline_mode = #tpu.pipeline_mode<synchronous>, transform_indices = @transform_2, window_bounds = array<i64: 128, 256>}, {pipeline_mode = #tpu.pipeline_mode<synchronous>, transform_indices = @transform_3, window_bounds = array<i64: 1, 256>}, {transform_indices = @transform_4, window_bounds = array<i64: 64, 256>}]} {
    %c0 = arith.constant 0 : index
    %c0_0 = arith.constant 0 : index
    %0 = vector.load %arg1[%c0, %c0_0] : memref<64x256xf32, #tpu.memory_space<vmem>>, vector<64x256xf32>
    %c0_1 = arith.constant 0 : index
    %c0_2 = arith.constant 0 : index
    %1 = vector.load %arg2[%c0_1, %c0_2] : memref<256x128xf32, #tpu.memory_space<vmem>>, vector<256x128xf32>
    %cst = arith.constant dense<0.000000e+00> : vector<64x128xf32>
    %2 = tpu.matmul %0, %1, %cst {dimension_numbers = #tpu.dot_dimension_numbers<[1], [0], [0], [1], [0, 0, 1, 1], [], []>} : vector<64x256xf32>, vector<256x128xf32>, vector<64x128xf32> -> vector<64x128xf32>
    %3 = math.tanh %2 : vector<64x128xf32>
    %4 = arith.negf %2 : vector<64x128xf32>
    %5 = math.exp %4 : vector<64x128xf32>
    %cst_3 = arith.constant 1.000000e+00 : f32
    %6 = vector.broadcast %cst_3 : f32 to vector<64x128xf32>
    %7 = arith.addf %6, %5 : vector<64x128xf32>
    %8 = arith.divf %6, %7 : vector<64x128xf32>
    %9 = arith.mulf %3, %8 : vector<64x128xf32>
    %c0_4 = arith.constant 0 : index
    %c0_5 = arith.constant 0 : index
    %10 = vector.load %arg3[%c0_4, %c0_5] : memref<128x256xf32, #tpu.memory_space<vmem>>, vector<128x256xf32>
    %cst_6 = arith.constant dense<0.000000e+00> : vector<64x256xf32>
    %11 = tpu.matmul %9, %10, %cst_6 {dimension_numbers = #tpu.dot_dimension_numbers<[1], [0], [0], [1], [0, 0, 1, 1], [], []>} : vector<64x128xf32>, vector<128x256xf32>, vector<64x256xf32> -> vector<64x256xf32>
    %c0_7 = arith.constant 0 : index
    %c0_8 = arith.constant 0 : index
    %12 = vector.load %arg4[%c0_7, %c0_8] : memref<1x256xf32, #tpu.memory_space<vmem>>, vector<1x256xf32>
    %13 = vector.broadcast %12 : vector<1x256xf32> to vector<64x256xf32>
    %14 = arith.addf %11, %13 : vector<64x256xf32>
    %c0_9 = arith.constant 0 : index
    %c0_10 = arith.constant 0 : index
    %15 = vector.load %arg5[%c0_9, %c0_10] : memref<64x256xf32, #tpu.memory_space<vmem>>, vector<64x256xf32>
    tpu.vector_store %arg5[%c0_9, %c0_10], %14 {strides = array<i32>} : memref<64x256xf32, #tpu.memory_space<vmem>>, vector<64x256xf32>,
    return
  }
  func.func @transform_0(%arg0: i32) -> (i32, i32) {
    %c0_i32 = arith.constant 0 : i32
    %c0_i32_0 = arith.constant 0 : i32
    return %arg0, %c0_i32 : i32, i32
  }
  func.func @transform_1(%arg0: i32) -> (i32, i32) {
    %c0_i32 = arith.constant 0 : i32
    %c0_i32_0 = arith.constant 0 : i32
    %c0_i32_1 = arith.constant 0 : i32
    return %c0_i32, %c0_i32_0 : i32, i32
  }
  func.func @transform_2(%arg0: i32) -> (i32, i32) {
    %c0_i32 = arith.constant 0 : i32
    %c0_i32_0 = arith.constant 0 : i32
    %c0_i32_1 = arith.constant 0 : i32
    return %c0_i32, %c0_i32_0 : i32, i32
  }
  func.func @transform_3(%arg0: i32) -> (i32, i32) {
    %c0_i32 = arith.constant 0 : i32
    %c0_i32_0 = arith.constant 0 : i32
    %c0_i32_1 = arith.constant 0 : i32
    return %c0_i32, %c0_i32_0 : i32, i32
  }
  func.func @transform_4(%arg0: i32) -> (i32, i32) {
    %c0_i32 = arith.constant 0 : i32
    %c0_i32_0 = arith.constant 0 : i32
    return %arg0, %c0_i32 : i32, i32
  }
}

</mosaic_0001>

<llo_original>
// kernel: tpu_custom_call.1
$region0: #{tpu_custom_call.1}
  #allocation0 [shape = 'u32[]', space=smem, size = 0x4, offset = 0x4, fixed_abs, tag = 'smem constant byte address 0x4 - core index']
  #allocation1 [shape = 'u32[144,128]{1,0:T(1,128)}', space=vmem, size = 0x12000, scoped, tag = 'internal scratch']
  %s0 = inlined_call_operand.hbm [shape: f32[64,256], index: 0, kind: input, shape index: {}]
  %s1 = inlined_call_operand.hbm [shape: f32[256,128], index: 1, kind: input, shape index: {}]
  %s2 = inlined_call_operand.hbm [shape: f32[128,256], index: 2, kind: input, shape index: {}]
  %s3 = inlined_call_operand.vmem [shape: f32[1,256], index: 3, kind: input, shape index: {}]
  %s4 = inlined_call_operand.hbm [shape: f32[64,256], index: 4, kind: output, shape index: {}]
  %s5 = sld [smem:[#allocation0]]
  $region38: #{tpu_custom_call.1} parent=0
    _
  %s7 = ssub.s32 1, %s5
  %s8 = scalar_select 0, %s7, %s5
  $region1: #{tpu_custom_call.1} parent=0
    #allocation2 [shape = 'u8[65536]{0}', space=vmem, size = 0x10000, scoped, tag = 'input window, operand 0, single buffered']
    #allocation3 [shape = 's32[1]{0}', space=sflag, size = 0x4, scoped, tag = 'scoped memory for tpu_custom_call.1']
    #allocation4 [shape = 's32[1]{0}', space=sflag, size = 0x4, scoped, tag = 'scoped memory for tpu_custom_call.1']
    #allocation5 [shape = 'u8[131072]{0}', space=vmem, size = 0x20000, scoped, tag = 'input window, operand 1, single buffered']
    #allocation6 [shape = 's32[1]{0}', space=sflag, size = 0x4, scoped, tag = 'scoped memory for tpu_custom_call.1']
    #allocation7 [shape = 'u8[131072]{0}', space=vmem, size = 0x20000, scoped, tag = 'input window, operand 2, single buffered']
    #allocation8 [shape = 'u8[65536]{0}', space=vmem, size = 0x10000, scoped, tag = 'output window, operand 0, single buffered']
    %9 = vsyncpa [#allocation3], 0
    %10 = vsyncpa [#allocation6], 0
    %11 = vsyncpa [#allocation4], 0
    // Predicated region
    $region2: #{tpu_custom_call.1} parent=1 // pred_check
      _
    $region3: #{tpu_custom_call.1} parent=1 // pred_check_branch
      %13 = sbr.rel (0) target = $region5
    $region4: #{tpu_custom_call.1} parent=1 // pred_region
      %s15 = ssub.s32 2048, 2048
      %16 = vsyncadd [#allocation3], %s15
      %s17 = sshll.u32 [#allocation2], 4
      %s18 = int_to_ptr.vmem [resolvable:$true] %s17
      %23 = dma.hbm_to_vmem [thread:$0]  %s0, 2048, %s18, [#allocation3], 256, 256, 16
    $region5: #{tpu_custom_call.1} parent=1 // pred_fallthru
      _
    // Predicated region
    $region6: #{tpu_custom_call.1} parent=1 // pred_check
      _
    $region7: #{tpu_custom_call.1} parent=1 // pred_check_branch
      %25 = sbr.rel (0) target = $region9
    $region8: #{tpu_custom_call.1} parent=1 // pred_region
      %s27 = ssub.s32 4096, 4096
      %28 = vsyncadd [#allocation6], %s27
      %s29 = sshll.u32 [#allocation5], 4
      %s30 = int_to_ptr.vmem [resolvable:$true] %s29
      %35 = dma.hbm_to_vmem [thread:$0]  %s1, 4096, %s30, [#allocation6], 128, 128, 8
    $region9: #{tpu_custom_call.1} parent=1 // pred_fallthru
      _
    // Predicated region
    $region10: #{tpu_custom_call.1} parent=1 // pred_check
      _
    $region11: #{tpu_custom_call.1} parent=1 // pred_check_branch
      %37 = sbr.rel (0) target = $region13
    $region12: #{tpu_custom_call.1} parent=1 // pred_region
      %s39 = ssub.s32 4096, 4096
      %40 = vsyncadd [#allocation6], %s39
      %s41 = sshll.u32 [#allocation7], 4
      %s42 = int_to_ptr.vmem [resolvable:$true] %s41
      %47 = dma.hbm_to_vmem [thread:$0]  %s2, 4096, %s42, [#allocation6], 256, 256, 16
    $region13: #{tpu_custom_call.1} parent=1 // pred_fallthru
      _
    // Predicated region
    $region14: #{tpu_custom_call.1} parent=1 // pred_check
      _
    $region15: #{tpu_custom_call.1} parent=1 // pred_check_branch
      %49 = sbr.rel (0) target = $region17
    $region16: #{tpu_custom_call.1} parent=1 // pred_region
      _
    $region17: #{tpu_custom_call.1} parent=1 // pred_fallthru
      _
    // Predicated region
    $region18: #{tpu_custom_call.1} parent=1 // pred_check
      _
    $region19: #{tpu_custom_call.1} parent=1 // pred_check_branch
      %51 = sbr.rel (0) target = $region21
    $region20: #{tpu_custom_call.1} parent=1 // pred_region
      %52 = dma.done [#allocation3], 2048
    $region21: #{tpu_custom_call.1} parent=1 // pred_fallthru
      _
    // Predicated region
    $region22: #{tpu_custom_call.1} parent=1 // pred_check
      _
    $region23: #{tpu_custom_call.1} parent=1 // pred_check_branch
      %54 = sbr.rel (0) target = $region25
    $region24: #{tpu_custom_call.1} parent=1 // pred_region
      %55 = dma.done [#allocation6], 4096
    $region25: #{tpu_custom_call.1} parent=1 // pred_fallthru
      _
    // Predicated region
    $region26: #{tpu_custom_call.1} parent=1 // pred_check
      _
    $region27: #{tpu_custom_call.1} parent=1 // pred_check_branch
      %57 = sbr.rel (0) target = $region29
    $region28: #{tpu_custom_call.1} parent=1 // pred_region
      %58 = dma.done [#allocation6], 4096
    $region29: #{tpu_custom_call.1} parent=1 // pred_fallthru
      _
    %v59 = vld [vmem:[#allocation2] sm:$0xff]
    %v60 = vld [vmem:[#allocation2 + $0x8] sm:$0xff]
    %v61 = vld [vmem:[#allocation2 + $0x10] sm:$0xff]
    %v62 = vld [vmem:[#allocation2 + $0x18] sm:$0xff]
    %v63 = vld [vmem:[#allocation2 + $0x20] sm:$0xff]
    %v64 = vld [vmem:[#allocation2 + $0x28] sm:$0xff]
    %v65 = vld [vmem:[#allocation2 + $0x30] sm:$0xff]
    %v66 = vld [vmem:[#allocation2 + $0x38] sm:$0xff]
    %v67 = vld [vmem:[#allocation2 + $0x40] sm:$0xff]
    %v68 = vld [vmem:[#allocation2 + $0x48] sm:$0xff]
    %v69 = vld [vmem:[#allocation2 + $0x50] sm:$0xff]
    %v70 = vld [vmem:[#allocation2 + $0x58] sm:$0xff]
    %v71 = vld [vmem:[#allocation2 + $0x60] sm:$0xff]
    %v72 = vld [vmem:[#allocation2 + $0x68] sm:$0xff]
    %v73 = vld [vmem:[#allocation2 + $0x70] sm:$0xff]
    %v74 = vld [vmem:[#allocation2 + $0x78] sm:$0xff]
    %v75 = vld [vmem:[#allocation5] sm:$0xff]
    %v76 = vld [vmem:[#allocation5 + $0x8] sm:$0xff]
    %v77 = vld [vmem:[#allocation5 + $0x10] sm:$0xff]
    %v78 = vld [vmem:[#allocation5 + $0x18] sm:$0xff]
    %v79 = vld [vmem:[#allocation5 + $0x20] sm:$0xff]
    %v80 = vld [vmem:[#allocation5 + $0x28] sm:$0xff]
    %v81 = vld [vmem:[#allocation5 + $0x30] sm:$0xff]
    %v82 = vld [vmem:[#allocation5 + $0x38] sm:$0xff]
    %v83 = vld [vmem:[#allocation5 + $0x40] sm:$0xff]
    %v84 = vld [vmem:[#allocation5 + $0x48] sm:$0xff]
    %v85 = vld [vmem:[#allocation5 + $0x50] sm:$0xff]
    %v86 = vld [vmem:[#allocation5 + $0x58] sm:$0xff]
    %v87 = vld [vmem:[#allocation5 + $0x60] sm:$0xff]
    %v88 = vld [vmem:[#allocation5 + $0x68] sm:$0xff]
    %v89 = vld [vmem:[#allocation5 + $0x70] sm:$0xff]
    %v90 = vld [vmem:[#allocation5 + $0x78] sm:$0xff]
    %v91 = vld [vmem:[#allocation5 + $0x80] sm:$0xff]
    %v92 = vld [vmem:[#allocation5 + $0x88] sm:$0xff]
    %v93 = vld [vmem:[#allocation5 + $0x90] sm:$0xff]
    %v94 = vld [vmem:[#allocation5 + $0x98] sm:$0xff]
    %v95 = vld [vmem:[#allocation5 + $0xa0] sm:$0xff]
    %v96 = vld [vmem:[#allocation5 + $0xa8] sm:$0xff]
    %v97 = vld [vmem:[#allocation5 + $0xb0] sm:$0xff]
    %v98 = vld [vmem:[#allocation5 + $0xb8] sm:$0xff]
    %v99 = vld [vmem:[#allocation5 + $0xc0] sm:$0xff]
    %v100 = vld [vmem:[#allocation5 + $0xc8] sm:$0xff]
    %v101 = vld [vmem:[#allocation5 + $0xd0] sm:$0xff]
    %v102 = vld [vmem:[#allocation5 + $0xd8] sm:$0xff]
    %v103 = vld [vmem:[#allocation5 + $0xe0] sm:$0xff]
    %v104 = vld [vmem:[#allocation5 + $0xe8] sm:$0xff]
    %v105 = vld [vmem:[#allocation5 + $0xf0] sm:$0xff]
    %v106 = vld [vmem:[#allocation5 + $0xf8] sm:$0xff]
    %107 = vmatprep.subr.mxu0 0.0
    %108 = vmatpush1.msra.mxu0 %v75
    %109 = vmatprep.subr.mxu0 0.0
    %110 = vmatpush1.msra.mxu0 %v76
    %111 = vmatprep.subr.mxu0 0.0
    %112 = vmatpush1.msra.mxu0 %v77
    %113 = vmatprep.subr.mxu0 0.0
    %114 = vmatpush1.msra.mxu0 %v78
    %115 = vmatprep.subr.mxu0 0.0
    %116 = vmatpush1.msra.mxu0 %v79
    %117 = vmatprep.subr.mxu0 0.0
    %118 = vmatpush1.msra.mxu0 %v80
    %119 = vmatprep.subr.mxu0 0.0
    %120 = vmatpush1.msra.mxu0 %v81
    %121 = vmatprep.subr.mxu0 0.0
    %122 = vmatpush1.msra.mxu0 %v82
    %123 = vmatprep.subr.mxu0 0.0
    %124 = vmatpush1.msra.mxu0 %v83
    %125 = vmatprep.subr.mxu0 0.0
    %126 = vmatpush1.msra.mxu0 %v84
    %127 = vmatprep.subr.mxu0 0.0
    %128 = vmatpush1.msra.mxu0 %v85
    %129 = vmatprep.subr.mxu0 0.0
    %130 = vmatpush1.msra.mxu0 %v86
    %131 = vmatprep.subr.mxu0 0.0
    %132 = vmatpush1.msra.mxu0 %v87
    %133 = vmatprep.subr.mxu0 0.0
    %134 = vmatpush1.msra.mxu0 %v88
    %135 = vmatprep.subr.mxu0 0.0
    %136 = vmatpush1.msra.mxu0 %v89
    %137 = vmatprep.subr.mxu0 0.0
    %138 = vmatpush1.msra.mxu0 %v90
    %139 = vmatprep.subr.mxu0 0.0
    %140 = vmatpush1.msra.mxu0 %v91
    %141 = vmatprep.subr.mxu0 0.0
    %142 = vmatpush1.msra.mxu0 %v92
    %143 = vmatprep.subr.mxu0 0.0
    %144 = vmatpush1.msra.mxu0 %v93
    %145 = vmatprep.subr.mxu0 0.0
    %146 = vmatpush1.msra.mxu0 %v94
    %147 = vmatprep.subr.mxu0 0.0
    %148 = vmatpush1.msra.mxu0 %v95
    %149 = vmatprep.subr.mxu0 0.0
    %150 = vmatpush1.msra.mxu0 %v96
    %151 = vmatprep.subr.mxu0 0.0
    %152 = vmatpush1.msra.mxu0 %v97
    %153 = vmatprep.subr.mxu0 0.0
    %154 = vmatpush1.msra.mxu0 %v98
    %155 = vmatprep.subr.mxu0 0.0
    %156 = vmatpush1.msra.mxu0 %v99
    %157 = vmatprep.subr.mxu0 0.0
    %158 = vmatpush1.msra.mxu0 %v100
    %159 = vmatprep.subr.mxu0 0.0
    %160 = vmatpush1.msra.mxu0 %v101
    %161 = vmatprep.subr.mxu0 0.0
    %162 = vmatpush1.msra.mxu0 %v102
    %163 = vmatprep.subr.mxu0 0.0
    %164 = vmatpush1.msra.mxu0 %v103
    %165 = vmatprep.subr.mxu0 0.0
    %166 = vmatpush1.msra.mxu0 %v104
    %167 = vmatprep.subr.mxu0 0.0
    %168 = vmatpush1.msra.mxu0 %v105
    %169 = vmatprep.subr.mxu0 0.0
    %170 = vmatpush1.msra.mxu0 %v106
    %171 = vmatprep.mubr.f32.mxu0 %v60
    %172 = vmatmul.mubr.f32.gmra.mrb[0].mxu0 %v59
    %v173 = vpop.f32.mrb[0].mxu0
    %v174 = vadd.f32 0.0, %v173
    %v175 = vpop.f32.mrb[0].mxu0
    %176 = vmatprep.mubr.f32.mxu0 %v62
    %177 = vmatmul.mubr.f32.gmra.mrb[0].mxu0 %v61
    %v178 = vpop.f32.mrb[0].mxu0
    %v179 = vadd.f32 0.0, %v178
    %v180 = vpop.f32.mrb[0].mxu0
    %181 = vmatprep.mubr.f32.mxu0 %v64
    %182 = vmatmul.mubr.f32.gmra.mrb[0].mxu0 %v63
    %v183 = vpop.f32.mrb[0].mxu0
    %v184 = vadd.f32 0.0, %v183
    %v185 = vpop.f32.mrb[0].mxu0
    %186 = vmatprep.mubr.f32.mxu0 %v66
    %187 = vmatmul.mubr.f32.gmra.mrb[0].mxu0 %v65
    %v188 = vpop.f32.mrb[0].mxu0
    %v189 = vadd.f32 0.0, %v188
    %v190 = vpop.f32.mrb[0].mxu0
    %191 = vmatprep.mubr.f32.mxu0 %v68
    %192 = vmatmul.mubr.f32.gmra.mrb[0].mxu0 %v67
    %v193 = vpop.f32.mrb[0].mxu0
    %v194 = vadd.f32 0.0, %v193
    %v195 = vpop.f32.mrb[0].mxu0
    %196 = vmatprep.mubr.f32.mxu0 %v70
    %197 = vmatmul.mubr.f32.gmra.mrb[0].mxu0 %v69
    %v198 = vpop.f32.mrb[0].mxu0
    %v199 = vadd.f32 0.0, %v198
    %v200 = vpop.f32.mrb[0].mxu0
    %201 = vmatprep.mubr.f32.mxu0 %v72
    %202 = vmatmul.mubr.f32.gmra.mrb[0].mxu0 %v71
    %v203 = vpop.f32.mrb[0].mxu0
    %v204 = vadd.f32 0.0, %v203
    %v205 = vpop.f32.mrb[0].mxu0
    %206 = vmatprep.mubr.f32.mxu0 %v74
    %207 = vmatmul.mubr.f32.gmra.mrb[0].mxu0 %v73
    %v208 = vpop.f32.mrb[0].mxu0
    %v209 = vadd.f32 0.0, %v208
    %v210 = vpop.f32.mrb[0].mxu0
    %211 = vdwg.mxu0
    %v212 = vtanh.pop %v174
    %v213 = vtanh.pop %v179
    %v214 = vtanh.pop %v184
    %v215 = vtanh.pop %v189
    %v216 = vtanh.pop %v194
    %v217 = vtanh.pop %v199
    %v218 = vtanh.pop %v204
    %v219 = vtanh.pop %v209
    %v220 = vxor.u32 %v174, 2147483648
    %v221 = vxor.u32 %v179, 2147483648
    %v222 = vxor.u32 %v184, 2147483648
    %v223 = vxor.u32 %v189, 2147483648
    %v224 = vxor.u32 %v194, 2147483648
    %v225 = vxor.u32 %v199, 2147483648
    %v226 = vxor.u32 %v204, 2147483648
    %v227 = vxor.u32 %v209, 2147483648
    %v228 = vmul.f32 %v220, 1.442695
    %v229 = vpow.pop %v228
    %v230 = vmul.f32 %v221, 1.442695
    %v231 = vpow.pop %v230
    %v232 = vmul.f32 %v222, 1.442695
    %v233 = vpow.pop %v232
    %v234 = vmul.f32 %v223, 1.442695
    %v235 = vpow.pop %v234
    %v236 = vmul.f32 %v224, 1.442695
    %v237 = vpow.pop %v236
    %v238 = vmul.f32 %v225, 1.442695
    %v239 = vpow.pop %v238
    %v240 = vmul.f32 %v226, 1.442695
    %v241 = vpow.pop %v240
    %v242 = vmul.f32 %v227, 1.442695
    %v243 = vpow.pop %v242
    %v244 = vadd.f32 %v229, 1.0
    %v245 = vadd.f32 %v231, 1.0
    %v246 = vadd.f32 %v233, 1.0
    %v247 = vadd.f32 %v235, 1.0
    %v248 = vadd.f32 %v237, 1.0
    %v249 = vadd.f32 %v239, 1.0
    %v250 = vadd.f32 %v241, 1.0
    %v251 = vadd.f32 %v243, 1.0
    %v252 = vrcp.pop %v244
    %v253 = vmul.f32 1.0, %v252
    %v254 = vrcp.pop %v245
    %v255 = vmul.f32 1.0, %v254
    %v256 = vrcp.pop %v246
    %v257 = vmul.f32 1.0, %v256
    %v258 = vrcp.pop %v247
    %v259 = vmul.f32 1.0, %v258
    %v260 = vrcp.pop %v248
    %v261 = vmul.f32 1.0, %v260
    %v262 = vrcp.pop %v249
    %v263 = vmul.f32 1.0, %v262
    %v264 = vrcp.pop %v250
    %v265 = vmul.f32 1.0, %v264
    %v266 = vrcp.pop %v251
    %v267 = vmul.f32 1.0, %v266
    %v268 = vmul.f32 %v212, %v253
    %v269 = vmul.f32 %v213, %v255
    %v270 = vmul.f32 %v214, %v257
    %v271 = vmul.f32 %v215, %v259
    %v272 = vmul.f32 %v216, %v261
    %v273 = vmul.f32 %v217, %v263
    %v274 = vmul.f32 %v218, %v265
    %v275 = vmul.f32 %v219, %v267
    %v276 = vld [vmem:[#allocation7] sm:$0xff]
    %v277 = vld [vmem:[#allocation7 + $0x8] sm:$0xff]
    %v278 = vld [vmem:[#allocation7 + $0x10] sm:$0xff]
    %v279 = vld [vmem:[#allocation7 + $0x18] sm:$0xff]
    %v280 = vld [vmem:[#allocation7 + $0x20] sm:$0xff]
    %v281 = vld [vmem:[#allocation7 + $0x28] sm:$0xff]
    %v282 = vld [vmem:[#allocation7 + $0x30] sm:$0xff]
    %v283 = vld [vmem:[#allocation7 + $0x38] sm:$0xff]
    %v284 = vld [vmem:[#allocation7 + $0x40] sm:$0xff]
    %v285 = vld [vmem:[#allocation7 + $0x48] sm:$0xff]
    %v286 = vld [vmem:[#allocation7 + $0x50] sm:$0xff]
    %v287 = vld [vmem:[#allocation7 + $0x58] sm:$0xff]
    %v288 = vld [vmem:[#allocation7 + $0x60] sm:$0xff]
    %v289 = vld [vmem:[#allocation7 + $0x68] sm:$0xff]
    %v290 = vld [vmem:[#allocation7 + $0x70] sm:$0xff]
    %v291 = vld [vmem:[#allocation7 + $0x78] sm:$0xff]
    %v292 = vld [vmem:[#allocation7 + $0x80] sm:$0xff]
    %v293 = vld [vmem:[#allocation7 + $0x88] sm:$0xff]
    %v294 = vld [vmem:[#allocation7 + $0x90] sm:$0xff]
    %v295 = vld [vmem:[#allocation7 + $0x98] sm:$0xff]
    %v296 = vld [vmem:[#allocation7 + $0xa0] sm:$0xff]
    %v297 = vld [vmem:[#allocation7 + $0xa8] sm:$0xff]
    %v298 = vld [vmem:[#allocation7 + $0xb0] sm:$0xff]
    %v299 = vld [vmem:[#allocation7 + $0xb8] sm:$0xff]
    %v300 = vld [vmem:[#allocation7 + $0xc0] sm:$0xff]
    %v301 = vld [vmem:[#allocation7 + $0xc8] sm:$0xff]
    %v302 = vld [vmem:[#allocation7 + $0xd0] sm:$0xff]
    %v303 = vld [vmem:[#allocation7 + $0xd8] sm:$0xff]
    %v304 = vld [vmem:[#allocation7 + $0xe0] sm:$0xff]
    %v305 = vld [vmem:[#allocation7 + $0xe8] sm:$0xff]
    %v306 = vld [vmem:[#allocation7 + $0xf0] sm:$0xff]
    %v307 = vld [vmem:[#allocation7 + $0xf8] sm:$0xff]
    %v308 = vld [vmem:[%s3] sm:$0x3]
    %v310 = vlaneseq
    %v311 = vshrl.u32 %v310, 7
    %v312 = vsub.s32 0, %v311
    %v313 = vrot.slane %v308, %v312
    %v314 = vlaneseq
    %v315 = vshrl.u32 %v314, 7
    %v316 = vsub.s32 1, %v315
    %v317 = vrot.slane %v308, %v316
    %320 = vmatprep.subr.mxu0 %v277
    %321 = vmatpush1.msra.mxu0 %v276
    %322 = vmatprep.subr.mxu0 %v279
    %323 = vmatpush1.msra.mxu0 %v278
    %324 = vmatprep.subr.mxu0 %v281
    %325 = vmatpush1.msra.mxu0 %v280
    %326 = vmatprep.subr.mxu0 %v283
    %327 = vmatpush1.msra.mxu0 %v282
    %328 = vmatprep.subr.mxu0 %v285
    %329 = vmatpush1.msra.mxu0 %v284
    %330 = vmatprep.subr.mxu0 %v287
    %331 = vmatpush1.msra.mxu0 %v286
    %332 = vmatprep.subr.mxu0 %v289
    %333 = vmatpush1.msra.mxu0 %v288
    %334 = vmatprep.subr.mxu0 %v291
    %335 = vmatpush1.msra.mxu0 %v290
    %336 = vmatprep.subr.mxu0 %v293
    %337 = vmatpush1.msra.mxu0 %v292
    %338 = vmatprep.subr.mxu0 %v295
    %339 = vmatpush1.msra.mxu0 %v294
    %340 = vmatprep.subr.mxu0 %v297
    %341 = vmatpush1.msra.mxu0 %v296
    %342 = vmatprep.subr.mxu0 %v299
    %343 = vmatpush1.msra.mxu0 %v298
    %344 = vmatprep.subr.mxu0 %v301
    %345 = vmatpush1.msra.mxu0 %v300
    %346 = vmatprep.subr.mxu0 %v303
    %347 = vmatpush1.msra.mxu0 %v302
    %348 = vmatprep.subr.mxu0 %v305
    %349 = vmatpush1.msra.mxu0 %v304
    %350 = vmatprep.subr.mxu0 %v307
    %351 = vmatpush1.msra.mxu0 %v306
    %352 = vmatprep.subr.mxu0 0.0
    %353 = vmatpush1.msra.mxu0 0.0
    %354 = vmatprep.subr.mxu0 0.0
    %355 = vmatpush1.msra.mxu0 0.0
    %356 = vmatprep.subr.mxu0 0.0
    %357 = vmatpush1.msra.mxu0 0.0
    %358 = vmatprep.subr.mxu0 0.0
    %359 = vmatpush1.msra.mxu0 0.0
    %360 = vmatprep.subr.mxu0 0.0
    %361 = vmatpush1.msra.mxu0 0.0
    %362 = vmatprep.subr.mxu0 0.0
    %363 = vmatpush1.msra.mxu0 0.0
    %364 = vmatprep.subr.mxu0 0.0
    %365 = vmatpush1.msra.mxu0 0.0
    %366 = vmatprep.subr.mxu0 0.0
    %367 = vmatpush1.msra.mxu0 0.0
    %368 = vmatprep.subr.mxu0 0.0
    %369 = vmatpush1.msra.mxu0 0.0
    %370 = vmatprep.subr.mxu0 0.0
    %371 = vmatpush1.msra.mxu0 0.0
    %372 = vmatprep.subr.mxu0 0.0
    %373 = vmatpush1.msra.mxu0 0.0
    %374 = vmatprep.subr.mxu0 0.0
    %375 = vmatpush1.msra.mxu0 0.0
    %376 = vmatprep.subr.mxu0 0.0
    %377 = vmatpush1.msra.mxu0 0.0
    %378 = vmatprep.subr.mxu0 0.0
    %379 = vmatpush1.msra.mxu0 0.0
    %380 = vmatprep.subr.mxu0 0.0
    %381 = vmatpush1.msra.mxu0 0.0
    %382 = vmatprep.subr.mxu0 0.0
    %383 = vmatpush1.msra.mxu0 0.0
    %384 = vmatprep.mubr.f32.mxu0 0.0
    %385 = vmatmul.mubr.f32.gmra.mrb[0].mxu0 %v268
    %v386 = vpop.f32.mrb[0].mxu0
    %v387 = vadd.f32 %v313, %v386
    %v388 = vpop.f32.mrb[0].mxu0
    %v389 = vadd.f32 %v317, %v388
    %390 = vmatprep.mubr.f32.mxu0 0.0
    %391 = vmatmul.mubr.f32.gmra.mrb[0].mxu0 %v269
    %v392 = vpop.f32.mrb[0].mxu0
    %v393 = vadd.f32 %v313, %v392
    %v394 = vpop.f32.mrb[0].mxu0
    %v395 = vadd.f32 %v317, %v394
    %396 = vmatprep.mubr.f32.mxu0 0.0
    %397 = vmatmul.mubr.f32.gmra.mrb[0].mxu0 %v270
    %v398 = vpop.f32.mrb[0].mxu0
    %v399 = vadd.f32 %v313, %v398
    %v400 = vpop.f32.mrb[0].mxu0
    %v401 = vadd.f32 %v317, %v400
    %402 = vmatprep.mubr.f32.mxu0 0.0
    %403 = vmatmul.mubr.f32.gmra.mrb[0].mxu0 %v271
    %v404 = vpop.f32.mrb[0].mxu0
    %v405 = vadd.f32 %v313, %v404
    %v406 = vpop.f32.mrb[0].mxu0
    %v407 = vadd.f32 %v317, %v406
    %408 = vmatprep.mubr.f32.mxu0 0.0
    %409 = vmatmul.mubr.f32.gmra.mrb[0].mxu0 %v272
    %v410 = vpop.f32.mrb[0].mxu0
    %v411 = vadd.f32 %v313, %v410
    %v412 = vpop.f32.mrb[0].mxu0
    %v413 = vadd.f32 %v317, %v412
    %414 = vmatprep.mubr.f32.mxu0 0.0
    %415 = vmatmul.mubr.f32.gmra.mrb[0].mxu0 %v273
    %v416 = vpop.f32.mrb[0].mxu0
    %v417 = vadd.f32 %v313, %v416
    %v418 = vpop.f32.mrb[0].mxu0
    %v419 = vadd.f32 %v317, %v418
    %420 = vmatprep.mubr.f32.mxu0 0.0
    %421 = vmatmul.mubr.f32.gmra.mrb[0].mxu0 %v274
    %v422 = vpop.f32.mrb[0].mxu0
    %v423 = vadd.f32 %v313, %v422
    %v424 = vpop.f32.mrb[0].mxu0
    %v425 = vadd.f32 %v317, %v424
    %426 = vmatprep.mubr.f32.mxu0 0.0
    %427 = vmatmul.mubr.f32.gmra.mrb[0].mxu0 %v275
    %v428 = vpop.f32.mrb[0].mxu0
    %v429 = vadd.f32 %v313, %v428
    %v430 = vpop.f32.mrb[0].mxu0
    %v431 = vadd.f32 %v317, %v430
    %432 = vdwg.mxu0
    %433 = vst [vmem:[#allocation8] sm:$0xff] %v387
    %434 = vst [vmem:[#allocation8 + $0x8] sm:$0xff] %v389
    %435 = vst [vmem:[#allocation8 + $0x10] sm:$0xff] %v393
    %436 = vst [vmem:[#allocation8 + $0x18] sm:$0xff] %v395
    %437 = vst [vmem:[#allocation8 + $0x20] sm:$0xff] %v399
    %438 = vst [vmem:[#allocation8 + $0x28] sm:$0xff] %v401
    %439 = vst [vmem:[#allocation8 + $0x30] sm:$0xff] %v405
    %440 = vst [vmem:[#allocation8 + $0x38] sm:$0xff] %v407
    %441 = vst [vmem:[#allocation8 + $0x40] sm:$0xff] %v411
    %442 = vst [vmem:[#allocation8 + $0x48] sm:$0xff] %v413
    %443 = vst [vmem:[#allocation8 + $0x50] sm:$0xff] %v417
    %444 = vst [vmem:[#allocation8 + $0x58] sm:$0xff] %v419
    %445 = vst [vmem:[#allocation8 + $0x60] sm:$0xff] %v423
    %446 = vst [vmem:[#allocation8 + $0x68] sm:$0xff] %v425
    %447 = vst [vmem:[#allocation8 + $0x70] sm:$0xff] %v429
    %448 = vst [vmem:[#allocation8 + $0x78] sm:$0xff] %v431
    // Predicated region
    $region30: #{tpu_custom_call.1} parent=1 // pred_check
      _
    $region31: #{tpu_custom_call.1} parent=1 // pred_check_branch
      %450 = sbr.rel (0) target = $region33
    $region32: #{tpu_custom_call.1} parent=1 // pred_region
      %s452 = ssub.s32 2048, 2048
      %453 = vsyncadd [#allocation4], %s452
      %s454 = sshll.u32 [#allocation8], 4
      %s455 = int_to_ptr.vmem [resolvable:$true] %s454
      %460 = dma.vmem_to_hbm [thread:$0]  %s455, 2048, %s4, [#allocation4], 256, 256, 16
    $region33: #{tpu_custom_call.1} parent=1 // pred_fallthru
      _
    // Predicated region
    $region34: #{tpu_custom_call.1} parent=1 // pred_check
      _
    $region35: #{tpu_custom_call.1} parent=1 // pred_check_branch
      %462 = sbr.rel (0) target = $region37
    $region36: #{tpu_custom_call.1} parent=1 // pred_region
      %463 = dma.done [#allocation4], 2048
    $region37: #{tpu_custom_call.1} parent=1 // pred_fallthru
      _
    %464 = vsyncpa [#allocation3], 1
    %465 = vsyncpa [#allocation6], 1
    %466 = vsyncpa [#allocation4], 1

</llo_original>
